<compile_context>
chip_gen: v7x
topology: tpu7x:2x2x1
jax: 0.10.0
libtpu: 0.0.40
codegen_flags: <defaults>
</compile_context>

<pallas_src>
import functools

import jax
import jax.numpy as jnp
from jax.experimental import pallas as pl
from jax.experimental.pallas import tpu as pltpu

LANES = 128
SUBLANES = 8
MAX_BLOCK_ROWS = 8192          # 8192*128*4B = 4 MiB per input block
VMEM_LIMIT_BYTES = 48 * 1024 * 1024


def _round_up(x, m):
    return ((x + m - 1) // m) * m


def _int_pow(v, g):
    if g == 0:
        return jnp.ones_like(v)
    out = v
    for _ in range(g - 1):
        out = out * v
    return out


def _focal_terms(x, t, alpha, gamma, inv_one_plus_e=None):
    """Shared math: stable BCE-with-logits + focal modulation (elementwise)."""
    e = jnp.exp(-jnp.abs(x))
    # bce = max(x, 0) - x*t + log1p(exp(-|x|))   (numerically stable)
    bce = jnp.maximum(x, 0.0) - x * t + jnp.log1p(e)
    inv = (1.0 / (1.0 + e)) if inv_one_plus_e is None else inv_one_plus_e(e)
    p_sig = jnp.where(x >= 0.0, inv, e * inv)          # == sigmoid(x), stable
    one_m_p = 1.0 - p_sig
    if float(gamma) == int(gamma) and gamma >= 0:
        g = int(gamma)
        pg = _int_pow(p_sig, g)                        # avoid exp(log(.)) for int gamma
        qg = _int_pow(one_m_p, g)
    else:
        pg = p_sig ** gamma
        qg = one_m_p ** gamma
    return bce * (alpha * t * qg + (1.0 - t) * pg)


def _focal_kernel(p_ref, t_ref, o_ref, *, alpha, gamma, block_rows,
                  needs_mask, last_block_rows):
    x = p_ref[...].astype(jnp.float32)
    t = t_ref[...].astype(jnp.float32)

    # Route the divide to the EUP (vrcp) instead of the VALU.
    loss = _focal_terms(
        x, t, alpha, gamma,
        inv_one_plus_e=lambda e: pl.reciprocal(1.0 + e, approx=True))

    def _reduce_write(v):
        # Partial reduce block rows -> (8, 128); final cross-lane reduce in wrapper.
        o_ref[...] = v.reshape(block_rows // SUBLANES, SUBLANES, LANES).sum(axis=0)

    if not needs_mask:
        _reduce_write(loss)
    else:
        last = pl.num_programs(0) - 1

        @pl.when(pl.program_id(0) != last)
        def _():
            _reduce_write(loss)

        @pl.when(pl.program_id(0) == last)
        def _():
            # Block-local row indices only; all arithmetic stays < 2^20.
            rows = jax.lax.broadcasted_iota(jnp.int32, loss.shape, 0)
            _reduce_write(jnp.where(rows < last_block_rows, loss, 0.0))


def bce_focal_loss(preds, targets, alpha=0.25, gamma=2.0):
    """Pallas TPU implementation of BCEFocalLoss.forward (returns scalar f32)."""
    assert preds.shape == targets.shape
    n_total = preds.size

    p_flat = preds.reshape(-1)
    t_flat = targets.reshape(-1)

    R = n_total // LANES          # full lane-aligned rows handled by the kernel
    tail = n_total - R * LANES    # <128 leftover elements handled in plain JAX

    total = jnp.float32(0.0)

    if R > 0:
        p2 = p_flat[: R * LANES].reshape(R, LANES)
        t2 = t_flat[: R * LANES].reshape(R, LANES)

        # Block size: as large as possible (amortize per-step overhead) but
        # capped so the grid keeps ~4 steps (v7x dual-TC) and VMEM stays sane.
        tr = min(MAX_BLOCK_ROWS,
                 max(SUBLANES, _round_up(-(-R // 4), SUBLANES)))
        grid_rows = pl.cdiv(R, tr)

        needs_mask = (R % tr) != 0
        last_block_rows = R - (grid_rows - 1) * tr

        kernel = functools.partial(
            _focal_kernel, alpha=float(alpha), gamma=float(gamma),
            block_rows=int(tr), needs_mask=bool(needs_mask),
            last_block_rows=int(last_block_rows))

        partials = pl.pallas_call(
            kernel,
            out_shape=jax.ShapeDtypeStruct((grid_rows * SUBLANES, LANES),
                                           jnp.float32),
            grid_spec=pltpu.PrefetchScalarGridSpec(
                num_scalar_prefetch=0,
                grid=(grid_rows,),
                in_specs=[
                    pl.BlockSpec((tr, LANES), lambda i: (i, 0)),
                    pl.BlockSpec((tr, LANES), lambda i: (i, 0)),
                ],
                out_specs=pl.BlockSpec((SUBLANES, LANES), lambda i: (i, 0)),
            ),
            compiler_params=pltpu.CompilerParams(
                dimension_semantics=("parallel",),
                vmem_limit_bytes=VMEM_LIMIT_BYTES),
        )(p2, t2)

        total = total + jnp.sum(partials)

    if tail:
        # Tiny non-lane-aligned tail: no jnp.pad HBM copy, just plain JAX.
        xt = p_flat[R * LANES:].astype(jnp.float32)
        tt = t_flat[R * LANES:].astype(jnp.float32)
        total = total + jnp.sum(_focal_terms(xt, tt, float(alpha), float(gamma)))

    return total / jnp.float32(n_total)


def _reference(preds, targets, alpha=0.25, gamma=2.0):
    # Pure-JAX reference mirroring the PyTorch module.
    x = preds.astype(jnp.float32)
    t = targets.astype(jnp.float32)
    bce = jnp.maximum(x, 0.0) - x * t + jnp.log1p(jnp.exp(-jnp.abs(x)))
    p = jax.nn.sigmoid(x)
    loss = t * alpha * (1.0 - p) ** gamma * bce + (1.0 - t) * p ** gamma * bce
    return jnp.mean(loss)


if __name__ == "__main__":
    key = jax.random.PRNGKey(0)
    k1, k2 = jax.random.split(key)
    # NCHW-style logits and binary targets.
    preds = jax.random.normal(k1, (2, 4, 16, 16), dtype=jnp.float32)
    targets = (jax.random.uniform(k2, (2, 4, 16, 16)) > 0.5).astype(jnp.float32)

    out = bce_focal_loss(preds, targets)
    out = jax.block_until_ready(out)

    ref = _reference(preds, targets)
    # Tolerance accounts for the EUP approximate reciprocal in the sigmoid.
    assert jnp.allclose(out, ref, rtol=2e-3, atol=1e-4), (out, ref)
    print("KERNEL_OK")
</pallas_src>

<mosaic_0001>
module attributes {stable_mosaic.version = 11 : i64} {
  func.func @_focal_kernel(%arg0: i32, %arg1: memref<8x128xf32, #tpu.memory_space<vmem>>, %arg2: memref<8x128xf32, #tpu.memory_space<vmem>>, %arg3: memref<8x128xf32, #tpu.memory_space<vmem>>) attributes {dimension_semantics = [#tpu.dimension_semantics<parallel>], iteration_bounds = array<i64: 2>, scalar_prefetch = 0 : i64, scratch_operands = 0 : i64, tpu.core_type = #tpu.core_type<tc>, window_params = [{transform_indices = @transform_0, window_bounds = array<i64: 8, 128>}, {transform_indices = @transform_1, window_bounds = array<i64: 8, 128>}, {transform_indices = @transform_2, window_bounds = array<i64: 8, 128>}]} {
    %c0 = arith.constant 0 : index
    %c0_0 = arith.constant 0 : index
    %0 = vector.load %arg1[%c0, %c0_0] : memref<8x128xf32, #tpu.memory_space<vmem>>, vector<8x128xf32>
    %c0_1 = arith.constant 0 : index
    %c0_2 = arith.constant 0 : index
    %1 = vector.load %arg2[%c0_1, %c0_2] : memref<8x128xf32, #tpu.memory_space<vmem>>, vector<8x128xf32>
    %2 = math.absf %0 : vector<8x128xf32>
    %cst = arith.constant 0.000000e+00 : f32
    %3 = vector.broadcast %cst : f32 to vector<8x128xf32>
    %4 = arith.subf %3, %2 : vector<8x128xf32>
    %5 = math.exp %4 : vector<8x128xf32>
    %cst_3 = arith.constant 0.000000e+00 : f32
    %6 = vector.broadcast %cst_3 : f32 to vector<8x128xf32>
    %7 = arith.maximumf %0, %6 : vector<8x128xf32>
    %8 = arith.mulf %0, %1 : vector<8x128xf32>
    %9 = arith.subf %7, %8 : vector<8x128xf32>
    %10 = math.log1p %5 : vector<8x128xf32>
    %11 = arith.addf %9, %10 : vector<8x128xf32>
    %cst_4 = arith.constant 1.000000e+00 : f32
    %12 = vector.broadcast %cst_4 : f32 to vector<8x128xf32>
    %13 = arith.addf %12, %5 : vector<8x128xf32>
    %14 = tpu.reciprocal %13 {approx = true} : vector<8x128xf32> -> vector<8x128xf32>
    %cst_5 = arith.constant 0.000000e+00 : f32
    %15 = vector.broadcast %cst_5 : f32 to vector<8x128xf32>
    %16 = arith.cmpf oge, %0, %15 : vector<8x128xf32>
    %17 = arith.mulf %5, %14 : vector<8x128xf32>
    %18 = arith.select %16, %14, %17 : vector<8x128xi1>, vector<8x128xf32>
    %cst_6 = arith.constant 1.000000e+00 : f32
    %19 = vector.broadcast %cst_6 : f32 to vector<8x128xf32>
    %20 = arith.subf %19, %18 : vector<8x128xf32>
    %21 = arith.mulf %18, %18 : vector<8x128xf32>
    %22 = arith.mulf %20, %20 : vector<8x128xf32>
    %cst_7 = arith.constant 2.500000e-01 : f32
    %23 = vector.broadcast %cst_7 : f32 to vector<8x128xf32>
    %24 = arith.mulf %23, %1 : vector<8x128xf32>
    %25 = arith.mulf %24, %22 : vector<8x128xf32>
    %cst_8 = arith.constant 1.000000e+00 : f32
    %26 = vector.broadcast %cst_8 : f32 to vector<8x128xf32>
    %27 = arith.subf %26, %1 : vector<8x128xf32>
    %28 = arith.mulf %27, %21 : vector<8x128xf32>
    %29 = arith.addf %25, %28 : vector<8x128xf32>
    %30 = arith.mulf %11, %29 : vector<8x128xf32>
    %31 = vector.shape_cast %30 : vector<8x128xf32> to vector<1x8x128xf32>
    %cst_9 = arith.constant dense<0.000000e+00> : vector<8x128xf32>
    %32 = vector.multi_reduction <add>, %31, %cst_9 [0] : vector<1x8x128xf32> to vector<8x128xf32>
    %c0_10 = arith.constant 0 : index
    %c0_11 = arith.constant 0 : index
    %33 = vector.load %arg3[%c0_10, %c0_11] : memref<8x128xf32, #tpu.memory_space<vmem>>, vector<8x128xf32>
    tpu.vector_store %arg3[%c0_10, %c0_11], %32 {strides = array<i32>} : memref<8x128xf32, #tpu.memory_space<vmem>>, vector<8x128xf32>,
    return
  }
  func.func @transform_0(%arg0: i32) -> (i32, i32) {
    %c0_i32 = arith.constant 0 : i32
    %c0_i32_0 = arith.constant 0 : i32
    return %arg0, %c0_i32 : i32, i32
  }
  func.func @transform_1(%arg0: i32) -> (i32, i32) {
    %c0_i32 = arith.constant 0 : i32
    %c0_i32_0 = arith.constant 0 : i32
    return %arg0, %c0_i32 : i32, i32
  }
  func.func @transform_2(%arg0: i32) -> (i32, i32) {
    %c0_i32 = arith.constant 0 : i32
    %c0_i32_0 = arith.constant 0 : i32
    return %arg0, %c0_i32 : i32, i32
  }
}

</mosaic_0001>

<llo_original>
// kernel: tpu_custom_call.1
$region0: #{tpu_custom_call.1}
  #allocation0 [shape = 'u32[]', space=smem, size = 0x4, offset = 0x4, fixed_abs, tag = 'smem constant byte address 0x4 - core index']
  #allocation1 [shape = 'u32[144,128]{1,0:T(1,128)}', space=vmem, size = 0x12000, scoped, tag = 'internal scratch']
  %s0 = inlined_call_operand.hbm [shape: f32[16,128], index: 0, kind: input, shape index: {}]
  %s1 = inlined_call_operand.hbm [shape: f32[16,128], index: 1, kind: input, shape index: {}]
  %s2 = inlined_call_operand.hbm [shape: f32[16,128], index: 2, kind: output, shape index: {}]
  %s3 = sld [smem:[#allocation0]]
  $region49: #{tpu_custom_call.1} parent=0
    _
  %s5 = ssub.s32 1, %s3
  %s6 = scalar_select 0, %s5, %s3
  $region1: #{tpu_custom_call.1} parent=0
    #allocation2 [shape = 'u8[8192]{0}', space=vmem, size = 0x2000, scoped, tag = 'input window, operand 0']
    #allocation3 [shape = 's32[2]{0}', space=sflag, size = 0x8, scoped, tag = 'scoped memory for tpu_custom_call.1']
    #allocation4 [shape = 's32[2]{0}', space=sflag, size = 0x8, scoped, tag = 'scoped memory for tpu_custom_call.1']
    #allocation5 [shape = 'u8[8192]{0}', space=vmem, size = 0x2000, scoped, tag = 'input window, operand 1']
    #allocation6 [shape = 's32[2]{0}', space=sflag, size = 0x8, scoped, tag = 'scoped memory for tpu_custom_call.1']
    #allocation7 [shape = 'u8[8192]{0}', space=vmem, size = 0x2000, scoped, tag = 'output window, operand 0']
    %7 = vsyncpa [#allocation3], 0
    %s8 = scalar_lea.sflag [#allocation3], 1
    %9 = vsyncpa %s8, 0
    %10 = vsyncpa [#allocation6], 0
    %s11 = scalar_lea.sflag [#allocation6], 1
    %12 = vsyncpa %s11, 0
    %13 = vsyncpa [#allocation4], 0
    %s14 = scalar_lea.sflag [#allocation4], 1
    %15 = vsyncpa %s14, 0
    loop: start=0, step=1, limit=4
    $region2: #{tpu_custom_call.1} parent=1 // loop_pre_header
      _
    $region3: #{tpu_custom_call.1} parent=1 // loop_header
      %s17 = sphi 0, %s21
      %p18 = scmp.ge.s32.totalorder %s17, 4
      %s27 = sphi 0, %s29
      %s30 = sphi 0, %s27
      %s31 = sphi 0, %s30
      %s47 = sphi 0, %s31
      %s53 = sphi 0, %s55
      %s56 = sphi 0, %s53
      %s57 = sphi 0, %s56
      %s73 = sphi 0, %s57
      %s79 = sphi 0, %s81
      %s82 = sphi 0, %s79
      %s83 = sphi 0, %s82
      %s99 = sphi 0, %s83
    $region4: #{tpu_custom_call.1} parent=1 // loop_header_branch
      %20 = sbr.rel (%p18) target = $region8
    $region5: #{tpu_custom_call.1} parent=1 // loop_body
      %s22 = ssub.s32 %s17, 1
      %s23 = ssub.s32 %s17, 2
      %s24 = sadd.s32 %s17, 1
      %s25 = ssub.s32 %s17, %s24
      %p26 = scmp.eq.s32.totalorder %s25, 0
      %s28 = sadd.s32 %s27, 1
      %s29 = scalar_select %p26, %s27, %s28
      %p32 = pneg %p26
      %p33 = scmp.eq.s32.totalorder %s17, 1
      %p34 = por %p32, %p33
      %p35 = scmp.ne.s32.totalorder %s27, %s30
      %p36 = scmp.eq.s32.totalorder %s17, 0
      %p37 = por %p35, %p36
      %p38 = scmp.ne.s32.totalorder %s27, %s30
      %p39 = scmp.eq.s32.totalorder %s22, 1
      %p40 = por %p38, %p39
      %p41 = scmp.ne.s32.totalorder %s30, %s31
      %p42 = scmp.eq.s32.totalorder %s22, 0
      %p43 = por %p41, %p42
      %p44 = scmp.ne.s32.totalorder %s30, %s31
      %p45 = scmp.eq.s32.totalorder %s23, 1
      %p46 = por %p44, %p45
      %p48 = scmp.ne.s32.totalorder %s31, %s47
      %p49 = scmp.eq.s32.totalorder %s23, 0
      %p50 = por %p48, %p49
      %s51 = ssub.s32 %s17, %s24
      %p52 = scmp.eq.s32.totalorder %s51, 0
      %s54 = sadd.s32 %s53, 1
      %s55 = scalar_select %p52, %s53, %s54
      %p58 = pneg %p52
      %p59 = scmp.eq.s32.totalorder %s17, 1
      %p60 = por %p58, %p59
      %p61 = scmp.ne.s32.totalorder %s53, %s56
      %p62 = scmp.eq.s32.totalorder %s17, 0
      %p63 = por %p61, %p62
      %p64 = scmp.ne.s32.totalorder %s53, %s56
      %p65 = scmp.eq.s32.totalorder %s22, 1
      %p66 = por %p64, %p65
      %p67 = scmp.ne.s32.totalorder %s56, %s57
      %p68 = scmp.eq.s32.totalorder %s22, 0
      %p69 = por %p67, %p68
      %p70 = scmp.ne.s32.totalorder %s56, %s57
      %p71 = scmp.eq.s32.totalorder %s23, 1
      %p72 = por %p70, %p71
      %p74 = scmp.ne.s32.totalorder %s57, %s73
      %p75 = scmp.eq.s32.totalorder %s23, 0
      %p76 = por %p74, %p75
      %s77 = ssub.s32 %s17, %s24
      %p78 = scmp.eq.s32.totalorder %s77, 0
      %s80 = sadd.s32 %s79, 1
      %s81 = scalar_select %p78, %s79, %s80
      %p84 = pneg %p78
      %p85 = scmp.eq.s32.totalorder %s17, 1
      %p86 = por %p84, %p85
      %p87 = scmp.ne.s32.totalorder %s79, %s82
      %p88 = scmp.eq.s32.totalorder %s17, 0
      %p89 = por %p87, %p88
      %p90 = scmp.ne.s32.totalorder %s79, %s82
      %p91 = scmp.eq.s32.totalorder %s22, 1
      %p92 = por %p90, %p91
      %p93 = scmp.ne.s32.totalorder %s82, %s83
      %p94 = scmp.eq.s32.totalorder %s22, 0
      %p95 = por %p93, %p94
      %p96 = scmp.ne.s32.totalorder %s82, %s83
      %p97 = scmp.eq.s32.totalorder %s23, 1
      %p98 = por %p96, %p97
      %p100 = scmp.ne.s32.totalorder %s83, %s99
      %p101 = scmp.eq.s32.totalorder %s23, 0
      %p102 = por %p100, %p101
      %p103 = scmp.le.s32.totalorder 1, %s17
      %p104 = scmp.lt.s32.totalorder %s17, 3
      %p105 = pnand %p103, %p104
      %p106 = pneg %p105
      // Predicated region
      $region9: #{tpu_custom_call.1} parent=5 // pred_check
        _
      $region10: #{tpu_custom_call.1} parent=5 // pred_check_branch
        %108 = sbr.rel (%p105) target = $region12
      $region11: #{tpu_custom_call.1} parent=5 // pred_region
        %s109 = ssub.s32 %s17, 1
      $region12: #{tpu_custom_call.1} parent=5 // pred_fallthru
        _
      %p110 = scmp.lt.s32.totalorder %s17, 2
      // Predicated region
      $region13: #{tpu_custom_call.1} parent=5 // pred_check
        %p111 = pneg %p110
      $region14: #{tpu_custom_call.1} parent=5 // pred_check_branch
        %113 = sbr.rel (%p111) target = $region16
      $region15: #{tpu_custom_call.1} parent=5 // pred_region
        // Predicated region
        $region17: #{tpu_custom_call.1} parent=15 // pred_check
          %p114 = pneg %p37
        $region18: #{tpu_custom_call.1} parent=15 // pred_check_branch
          %116 = sbr.rel (%p114) target = $region20
        $region19: #{tpu_custom_call.1} parent=15 // pred_region
          %s117 = sand.u32 %s27, 1
          %s118 = scalar_lea.sflag [#allocation3], %s117
          %s119 = sand.u32 %s27, 1
          %s120 = smul.addr %s119, 8
          %s121 = scalar_lea.vmem [#allocation2], %s120
          %s123 = ssub.s32 128, 128
          %124 = vsyncadd %s118, %s123
          %s125 = smul.addr %s17, 128
          %s126 = scalar_lea.hbm %s0, %s125
          %s128 = sshll.u32 %s121, 4
          %s129 = int_to_ptr.vmem [resolvable:$true] %s128
          %131 = dma.hbm_to_vmem [thread:$0]  %s126, 128, %s129, %s118
        $region20: #{tpu_custom_call.1} parent=15 // pred_fallthru
          _
        // Predicated region
        $region21: #{tpu_custom_call.1} parent=15 // pred_check
          %p132 = pneg %p63
        $region22: #{tpu_custom_call.1} parent=15 // pred_check_branch
          %134 = sbr.rel (%p132) target = $region24
        $region23: #{tpu_custom_call.1} parent=15 // pred_region
          %s135 = sand.u32 %s53, 1
          %s136 = scalar_lea.sflag [#allocation6], %s135
          %s137 = sand.u32 %s53, 1
          %s138 = smul.addr %s137, 8
          %s139 = scalar_lea.vmem [#allocation5], %s138
          %s141 = ssub.s32 128, 128
          %142 = vsyncadd %s136, %s141
          %s143 = smul.addr %s17, 128
          %s144 = scalar_lea.hbm %s1, %s143
          %s146 = sshll.u32 %s139, 4
          %s147 = int_to_ptr.vmem [resolvable:$true] %s146
          %149 = dma.hbm_to_vmem [thread:$0]  %s144, 128, %s147, %s136
        $region24: #{tpu_custom_call.1} parent=15 // pred_fallthru
          _
      $region16: #{tpu_custom_call.1} parent=5 // pred_fallthru
        _
      %p150 = scmp.le.s32.totalorder 1, %s17
      %p151 = scmp.lt.s32.totalorder %s17, 3
      %p152 = pnand %p150, %p151
      %p153 = pneg %p152
      // Predicated region
      $region25: #{tpu_custom_call.1} parent=5 // pred_check
        _
      $region26: #{tpu_custom_call.1} parent=5 // pred_check_branch
        %155 = sbr.rel (%p152) target = $region28
      $region27: #{tpu_custom_call.1} parent=5 // pred_region
        %s156 = ssub.s32 %s17, 1
        %s157 = sand.u32 %s30, 1
        %s158 = scalar_lea.sflag [#allocation3], %s157
        %s159 = sand.u32 %s30, 1
        %s160 = smul.addr %s159, 8
        %s161 = scalar_lea.vmem [#allocation2], %s160
        // Predicated region
        $region29: #{tpu_custom_call.1} parent=27 // pred_check
          %p162 = pneg %p43
        $region30: #{tpu_custom_call.1} parent=27 // pred_check_branch
          %164 = sbr.rel (%p162) target = $region32
        $region31: #{tpu_custom_call.1} parent=27 // pred_region
          %165 = dma.done %s158, 128
        $region32: #{tpu_custom_call.1} parent=27 // pred_fallthru
          _
        %s166 = sand.u32 %s56, 1
        %s167 = scalar_lea.sflag [#allocation6], %s166
        %s168 = sand.u32 %s56, 1
        %s169 = smul.addr %s168, 8
        %s170 = scalar_lea.vmem [#allocation5], %s169
        // Predicated region
        $region33: #{tpu_custom_call.1} parent=27 // pred_check
          %p171 = pneg %p69
        $region34: #{tpu_custom_call.1} parent=27 // pred_check_branch
          %173 = sbr.rel (%p171) target = $region36
        $region35: #{tpu_custom_call.1} parent=27 // pred_region
          %174 = dma.done %s167, 128
        $region36: #{tpu_custom_call.1} parent=27 // pred_fallthru
          _
        %s175 = sand.u32 %s30, 1
        %s176 = scalar_lea.sflag [#allocation3], %s175
        %s177 = sand.u32 %s30, 1
        %s178 = smul.addr %s177, 8
        %s179 = scalar_lea.vmem [#allocation2], %s178
        %p180 = pneg %p43
        %p181 = pneg %p40
        %s182 = sand.u32 %s56, 1
        %s183 = scalar_lea.sflag [#allocation6], %s182
        %s184 = sand.u32 %s56, 1
        %s185 = smul.addr %s184, 8
        %s186 = scalar_lea.vmem [#allocation5], %s185
        %p187 = pneg %p69
        %p188 = pneg %p66
        %p189 = pneg %p95
        %p190 = pneg %p92
        %s191 = sand.u32 %s82, 1
        %s192 = scalar_lea.sflag [#allocation4], %s191
        %s193 = sand.u32 %s82, 1
        %s194 = smul.addr %s193, 8
        %s195 = scalar_lea.vmem [#allocation7], %s194
        %v196 = vld [vmem:[%s161] sm:$0xff]
        %v197 = vld [vmem:[%s170] sm:$0xff]
        %v198 = vand.u32 2147483647, %v196
        %v199 = vsub.f32 0.0, %v198
        %v200 = vmul.f32 %v199, 1.442695
        %v201 = vpow.pop %v200
        %v202 = vmax.f32 %v196, 0.0
        %v203 = vmul.f32 %v196, %v197
        %v204 = vsub.f32 %v202, %v203
        %v205 = vadd.f32 %v201, 1.0
        %v206 = vlog2.pop %v205
        %v207 = vmul.f32 %v206, 0.6931472
        %v208 = vmul.f32 -0.5, %v201
        %v209 = vadd.f32 %v208, 1.0
        %v210 = vmul.f32 %v209, %v201
        %v211 = vand.u32 2147483647, %v201
        %vm212 = vcmp.lt.f32.partialorder %v211, 0.0004427343
        %v213 = vsel %vm212, %v210, %v207
        %v214 = vadd.f32 %v204, %v213
        %v215 = vadd.f32 %v201, 1.0
        %v216 = vrcp.pop %v215
        %vm217 = vcmp.ge.f32.partialorder %v196, 0.0
        %v218 = vmul.f32 %v201, %v216
        %v219 = vsel %vm217, %v216, %v218
        %v220 = vsub.f32 1.0, %v219
        %v221 = vmul.f32 %v219, %v219
        %v222 = vmul.f32 %v220, %v220
        %v223 = vmul.f32 %v197, 0.25
        %v224 = vmul.f32 %v223, %v222
        %v225 = vsub.f32 1.0, %v197
        %v226 = vmul.f32 %v225, %v221
        %v227 = vadd.f32 %v224, %v226
        %v228 = vmul.f32 %v214, %v227
        %v229 = vadd.f32 %v228, 0.0
        %230 = vst [vmem:[%s195] sm:$0xff] %v229
        %s231 = sand.u32 %s82, 1
        %s232 = scalar_lea.sflag [#allocation4], %s231
        %s233 = sand.u32 %s82, 1
        %s234 = smul.addr %s233, 8
        %s235 = scalar_lea.vmem [#allocation7], %s234
        // Predicated region
        $region37: #{tpu_custom_call.1} parent=27 // pred_check
          %p236 = pneg %p92
        $region38: #{tpu_custom_call.1} parent=27 // pred_check_branch
          %238 = sbr.rel (%p236) target = $region40
        $region39: #{tpu_custom_call.1} parent=27 // pred_region
          %s240 = ssub.s32 128, 128
          %241 = vsyncadd %s232, %s240
          %s242 = smul.addr %s22, 128
          %s243 = scalar_lea.hbm %s2, %s242
          %s245 = sshll.u32 %s235, 4
          %s246 = int_to_ptr.vmem [resolvable:$true] %s245
          %248 = dma.vmem_to_hbm [thread:$0]  %s246, 128, %s243, %s232
        $region40: #{tpu_custom_call.1} parent=27 // pred_fallthru
          _
      $region28: #{tpu_custom_call.1} parent=5 // pred_fallthru
        _
      %p249 = scmp.le.s32.totalorder 2, %s17
      // Predicated region
      $region41: #{tpu_custom_call.1} parent=5 // pred_check
        %p250 = pneg %p249
      $region42: #{tpu_custom_call.1} parent=5 // pred_check_branch
        %252 = sbr.rel (%p250) target = $region44
      $region43: #{tpu_custom_call.1} parent=5 // pred_region
        %s253 = ssub.s32 %s17, 2
        // Predicated region
        $region45: #{tpu_custom_call.1} parent=43 // pred_check
          %p254 = pneg %p98
        $region46: #{tpu_custom_call.1} parent=43 // pred_check_branch
          %256 = sbr.rel (%p254) target = $region48
        $region47: #{tpu_custom_call.1} parent=43 // pred_region
          %s257 = sand.u32 %s83, 1
          %s258 = scalar_lea.sflag [#allocation4], %s257
          %s259 = sand.u32 %s83, 1
          %s260 = smul.addr %s259, 8
          %s261 = scalar_lea.vmem [#allocation7], %s260
          %262 = dma.done %s258, 128
        $region48: #{tpu_custom_call.1} parent=43 // pred_fallthru
          _
      $region44: #{tpu_custom_call.1} parent=5 // pred_fallthru
        _
    $region6: #{tpu_custom_call.1} parent=1 // loop_footer
      %s21 = sadd.s32 1, %s17
    $region7: #{tpu_custom_call.1} parent=1 // loop_footer_branch
      %16 = sbr.rel target = $region3
    $region8: #{tpu_custom_call.1} parent=1 // loop_exit
      _
    %263 = vsyncpa [#allocation3], 1
    %s264 = scalar_lea.sflag [#allocation3], 1
    %265 = vsyncpa %s264, 1
    %266 = vsyncpa [#allocation6], 1
    %s267 = scalar_lea.sflag [#allocation6], 1
    %268 = vsyncpa %s267, 1
    %269 = vsyncpa [#allocation4], 1
    %s270 = scalar_lea.sflag [#allocation4], 1
    %271 = vsyncpa %s270, 1

</llo_original>
